<compile_context>
chip_gen: v7x
topology: tpu7x:2x2x1
jax: 0.10.0
libtpu: 0.0.40
codegen_flags: <defaults>
</compile_context>

<pallas_src>
import jax
import jax.numpy as jnp
from jax.experimental import pallas as pl
from jax.experimental.pallas import tpu as pltpu

_LANES = 128


def _drop_path_kernel(scale_ref, x_ref, o_ref):
    # scale_ref: (n_tile, 1) in x.dtype; x_ref/o_ref: (n_tile, f_tile).
    o_ref[...] = x_ref[...] * scale_ref[...]


def _drop_path_residual_kernel(scale_ref, x_ref, r_ref, o_ref):
    # Fused DropPath + residual add: out = residual + scale * x.
    o_ref[...] = r_ref[...] + x_ref[...] * scale_ref[...]


def _block_budget_bytes(n_streams):
    """Per-block byte budget, tuned per TPU generation, kept inside the
    default scoped-VMEM limit (16 MiB v5e / 32 MiB v6e,v7x) so no
    vmem_limit_bytes override is needed."""
    scoped = 16 << 20   # conservative default (v5e / older / unknown)
    target = 2 << 20
    try:
        kind = jax.devices()[0].device_kind.lower()
        if "v7" in kind:
            scoped, target = 32 << 20, 8 << 20
        elif "v6" in kind:
            scoped, target = 32 << 20, 4 << 20
    except Exception:
        pass
    # Double-buffered streamed arrays (x, out, [residual]) + headroom for the
    # tiny scale buffers and compiler scratch.
    per_block = (scoped * 3 // 4) // (2 * n_streams)
    return max(1 << 20, min(per_block, target))


def _choose_tiles(N, F, dtype_bytes, block_bytes):
    """Pick (n_tile, f_tile) so the block is ~block_bytes, last-two-dim legal
    (multiple of (sublane_min, 128) or equal to the full extent)."""
    sublane_min = max(8, 32 // dtype_bytes)  # 8 f32, 16 bf16, 32 int8/fp8

    if F * sublane_min * dtype_bytes <= block_bytes:
        f_tile = F                           # whole feature dim fits
    else:
        f_tile = (block_bytes // (sublane_min * dtype_bytes)) // _LANES * _LANES
        f_tile = max(_LANES, min(f_tile, F))

    n_tile = block_bytes // max(1, f_tile * dtype_bytes)
    n_tile = max(sublane_min, (n_tile // sublane_min) * sublane_min)
    if n_tile >= N:
        n_tile = N                           # full batch dim is always legal
    return n_tile, f_tile


def drop_path(x, drop_prob, seed, training=True, residual=None):
    """DropPath forward.  x: (N, ...) float array.

    If `residual` is given, returns residual + DropPath(x) fused in one pass.
    Caller must vary `seed` per call/layer for independent masks.
    """
    if (not training) or drop_prob <= 0.0:
        return x if residual is None else x + residual

    keep_prob = 1.0 - float(drop_prob)
    N = x.shape[0]
    F = 1
    for d in x.shape[1:]:
        F *= d

    # Per-sample Bernoulli(keep_prob) mask -> scale in {0, 1/keep_prob},
    # pre-cast to x.dtype so the kernel multiply stays in x's dtype.
    key = jax.random.PRNGKey(seed)
    keep = jax.random.bernoulli(key, keep_prob, (N,))
    scale = (keep.astype(jnp.float32) * jnp.float32(1.0 / keep_prob))
    scale = scale.astype(x.dtype).reshape(N, 1)

    # Free (contiguous) reshape -- no pad, no trailing slice.
    x2 = x.reshape(N, F)

    dtype_bytes = jnp.dtype(x.dtype).itemsize
    n_streams = 2 if residual is None else 3
    block_bytes = _block_budget_bytes(n_streams)
    n_tile, f_tile = _choose_tiles(N, F, dtype_bytes, block_bytes)

    grid = (pl.cdiv(N, n_tile), pl.cdiv(F, f_tile))

    scale_spec = pl.BlockSpec((n_tile, 1), lambda i, j: (i, 0))
    data_spec = pl.BlockSpec((n_tile, f_tile), lambda i, j: (i, j))

    if residual is None:
        kernel = _drop_path_kernel
        in_specs = [scale_spec, data_spec]
        operands = (scale, x2)
    else:
        kernel = _drop_path_residual_kernel
        in_specs = [scale_spec, data_spec, data_spec]
        operands = (scale, x2, residual.reshape(N, F))

    out = pl.pallas_call(
        kernel,
        out_shape=jax.ShapeDtypeStruct((N, F), x.dtype),
        grid=grid,
        in_specs=in_specs,
        out_specs=data_spec,
        compiler_params=pltpu.CompilerParams(
            dimension_semantics=("parallel", "parallel")),
    )(*operands)

    return out.reshape(x.shape)


if __name__ == "__main__":
    import numpy as np

    key = jax.random.PRNGKey(0)
    x = jax.random.normal(key, (2, 4, 16, 16), dtype=jnp.float32)
    drop_prob = 0.5
    keep_prob = 1.0 - drop_prob

    # Training mode: apply the stochastic-depth mask via the Pallas kernel.
    y = jax.block_until_ready(drop_path(x, drop_prob, seed=1234, training=True))

    # Sanity: each sample must be either fully zeroed or scaled by 1/keep_prob.
    xn, yn = np.asarray(x), np.asarray(y)
    for i in range(xn.shape[0]):
        zeroed = np.allclose(yn[i], 0.0)
        scaled = np.allclose(yn[i], xn[i] / keep_prob, rtol=1e-5, atol=1e-5)
        assert zeroed or scaled, f"sample {i}: not a valid DropPath output"

    # Fused residual path: out = residual + DropPath(x) (same seed -> same mask).
    r = jax.random.normal(jax.random.PRNGKey(1), x.shape, dtype=jnp.float32)
    yf = jax.block_until_ready(
        drop_path(x, drop_prob, seed=1234, training=True, residual=r))
    assert np.allclose(np.asarray(yf), yn + np.asarray(r), rtol=1e-5, atol=1e-5)

    # Eval mode (or prob == 0): identity.
    y_eval = drop_path(x, drop_prob, seed=1234, training=False)
    assert np.allclose(np.asarray(y_eval), xn)

    print("KERNEL_OK")
</pallas_src>

<mosaic_0001>
module attributes {stable_mosaic.version = 11 : i64} {
  func.func @_drop_path_kernel(%arg0: i32, %arg1: i32, %arg2: memref<2x1xf32, #tpu.memory_space<vmem>>, %arg3: memref<2x1024xf32, #tpu.memory_space<vmem>>, %arg4: memref<2x1024xf32, #tpu.memory_space<vmem>>) attributes {dimension_semantics = [#tpu.dimension_semantics<parallel>, #tpu.dimension_semantics<parallel>], iteration_bounds = array<i64: 1, 1>, scalar_prefetch = 0 : i64, scratch_operands = 0 : i64, tpu.core_type = #tpu.core_type<tc>, window_params = [{transform_indices = @transform_0, window_bounds = array<i64: 2, 1>}, {transform_indices = @transform_1, window_bounds = array<i64: 2, 1024>}, {transform_indices = @transform_2, window_bounds = array<i64: 2, 1024>}]} {
    %c0 = arith.constant 0 : index
    %c0_0 = arith.constant 0 : index
    %0 = vector.load %arg3[%c0, %c0_0] : memref<2x1024xf32, #tpu.memory_space<vmem>>, vector<2x1024xf32>
    %c0_1 = arith.constant 0 : index
    %c0_2 = arith.constant 0 : index
    %1 = vector.load %arg2[%c0_1, %c0_2] : memref<2x1xf32, #tpu.memory_space<vmem>>, vector<2x1xf32>
    %2 = vector.broadcast %1 : vector<2x1xf32> to vector<2x1024xf32>
    %3 = arith.mulf %0, %2 : vector<2x1024xf32>
    %c0_3 = arith.constant 0 : index
    %c0_4 = arith.constant 0 : index
    %4 = vector.load %arg4[%c0_3, %c0_4] : memref<2x1024xf32, #tpu.memory_space<vmem>>, vector<2x1024xf32>
    tpu.vector_store %arg4[%c0_3, %c0_4], %3 {strides = array<i32>} : memref<2x1024xf32, #tpu.memory_space<vmem>>, vector<2x1024xf32>,
    return
  }
  func.func @transform_0(%arg0: i32, %arg1: i32) -> (i32, i32) {
    %c0_i32 = arith.constant 0 : i32
    %c0_i32_0 = arith.constant 0 : i32
    return %arg0, %c0_i32 : i32, i32
  }
  func.func @transform_1(%arg0: i32, %arg1: i32) -> (i32, i32) {
    %c0_i32 = arith.constant 0 : i32
    return %arg0, %arg1 : i32, i32
  }
  func.func @transform_2(%arg0: i32, %arg1: i32) -> (i32, i32) {
    %c0_i32 = arith.constant 0 : i32
    return %arg0, %arg1 : i32, i32
  }
}

</mosaic_0001>

<llo_original>
// kernel: tpu_custom_call.1
$region0: #{tpu_custom_call.1}
  #allocation0 [shape = 'u32[]', space=smem, size = 0x4, offset = 0x4, fixed_abs, tag = 'smem constant byte address 0x4 - core index']
  #allocation1 [shape = 'u32[144,128]{1,0:T(1,128)}', space=vmem, size = 0x12000, scoped, tag = 'internal scratch']
  %s0 = inlined_call_operand.vmem [shape: f32[2,1], index: 0, kind: input, shape index: {}]
  %s1 = inlined_call_operand.hbm [shape: f32[2,1024], index: 1, kind: input, shape index: {}]
  %s2 = inlined_call_operand.hbm [shape: f32[2,1024], index: 2, kind: output, shape index: {}]
  %s3 = sld [smem:[#allocation0]]
  $region22: #{tpu_custom_call.1} parent=0
    _
  %s5 = ssub.s32 1, %s3
  %s6 = scalar_select 0, %s5, %s3
  $region1: #{tpu_custom_call.1} parent=0
    #allocation2 [shape = 'u8[8192]{0}', space=vmem, size = 0x2000, scoped, tag = 'input window, operand 1, single buffered']
    #allocation3 [shape = 's32[1]{0}', space=sflag, size = 0x4, scoped, tag = 'scoped memory for tpu_custom_call.1']
    #allocation4 [shape = 's32[1]{0}', space=sflag, size = 0x4, scoped, tag = 'scoped memory for tpu_custom_call.1']
    #allocation5 [shape = 'u8[8192]{0}', space=vmem, size = 0x2000, scoped, tag = 'output window, operand 0, single buffered']
    %7 = vsyncpa [#allocation3], 0
    %8 = vsyncpa [#allocation4], 0
    // Predicated region
    $region2: #{tpu_custom_call.1} parent=1 // pred_check
      _
    $region3: #{tpu_custom_call.1} parent=1 // pred_check_branch
      %10 = sbr.rel (0) target = $region5
    $region4: #{tpu_custom_call.1} parent=1 // pred_region
      _
    $region5: #{tpu_custom_call.1} parent=1 // pred_fallthru
      _
    // Predicated region
    $region6: #{tpu_custom_call.1} parent=1 // pred_check
      _
    $region7: #{tpu_custom_call.1} parent=1 // pred_check_branch
      %12 = sbr.rel (0) target = $region9
    $region8: #{tpu_custom_call.1} parent=1 // pred_region
      %s14 = ssub.s32 256, 256
      %15 = vsyncadd [#allocation3], %s14
      %s17 = sshll.u32 [#allocation2], 4
      %s18 = int_to_ptr.vmem [resolvable:$true] %s17
      %20 = dma.hbm_to_vmem [thread:$0]  %s1, 256, %s18, [#allocation3]
    $region9: #{tpu_custom_call.1} parent=1 // pred_fallthru
      _
    // Predicated region
    $region10: #{tpu_custom_call.1} parent=1 // pred_check
      _
    $region11: #{tpu_custom_call.1} parent=1 // pred_check_branch
      %22 = sbr.rel (0) target = $region13
    $region12: #{tpu_custom_call.1} parent=1 // pred_region
      %23 = dma.done [#allocation3], 256
    $region13: #{tpu_custom_call.1} parent=1 // pred_fallthru
      _
    %v24 = vld [vmem:[#allocation2] sm:$0xff]
    %v25 = vld [vmem:[#allocation2 + $0x8] sm:$0xff]
    %v26 = vld [vmem:[%s0] sm:$0x3]
    %28 = vset.pattern.permute.xlu0 0
    %29 = vperm.xlu0 %28, %v26
    %v30 = vpop.permute.xlu0 %29
    %v32 = vunpack.c.l.s4 269488144
    %v33 = vunpack.c.0.s8 %v32
    %v34 = vlaneseq
    %v35 = vshrl.u32 %v34, 7
    %v36 = vsub.s32 %v33, %v35
    %v37 = vrot.slane %v30, %v36
    %v39 = vmul.f32 %v24, %v37
    %v40 = vmul.f32 %v25, %v37
    %41 = vst [vmem:[#allocation5] sm:$0xff] %v39
    %42 = vst [vmem:[#allocation5 + $0x8] sm:$0xff] %v40
    // Predicated region
    $region14: #{tpu_custom_call.1} parent=1 // pred_check
      _
    $region15: #{tpu_custom_call.1} parent=1 // pred_check_branch
      %44 = sbr.rel (0) target = $region17
    $region16: #{tpu_custom_call.1} parent=1 // pred_region
      %s46 = ssub.s32 256, 256
      %47 = vsyncadd [#allocation4], %s46
      %s49 = sshll.u32 [#allocation5], 4
      %s50 = int_to_ptr.vmem [resolvable:$true] %s49
      %52 = dma.vmem_to_hbm [thread:$0]  %s50, 256, %s2, [#allocation4]
    $region17: #{tpu_custom_call.1} parent=1 // pred_fallthru
      _
    // Predicated region
    $region18: #{tpu_custom_call.1} parent=1 // pred_check
      _
    $region19: #{tpu_custom_call.1} parent=1 // pred_check_branch
      %54 = sbr.rel (0) target = $region21
    $region20: #{tpu_custom_call.1} parent=1 // pred_region
      %55 = dma.done [#allocation4], 256
    $region21: #{tpu_custom_call.1} parent=1 // pred_fallthru
      _
    %56 = vsyncpa [#allocation3], 1
    %57 = vsyncpa [#allocation4], 1

</llo_original>
